<compile_context>
chip_gen: v7x
topology: tpu7x:2x2x1
jax: 0.10.0
libtpu: 0.0.40
codegen_flags: <defaults>
</compile_context>

<pallas_src>
import math
import functools

import jax
import jax.numpy as jnp
from jax import lax
from jax.experimental import pallas as pl
from jax.experimental.pallas import tpu as pltpu


# ----------------------------- fused kernel ----------------------------------

def _attn_head_kernel(x_ref, wq_ref, wk_ref, wv_ref, woT_ref, b_ref,
                      o_ref, acc_ref, *, head_dim):
    # x_ref:   (1, N, D)   activations for batch element b
    # wq_ref:  (Hd, D)     rows [h*Hd:(h+1)*Hd]        of w_qkv   (bf16)
    # wk_ref:  (Hd, D)     rows [D + h*Hd : ...]       of w_qkv   (bf16)
    # wv_ref:  (Hd, D)     rows [2D + h*Hd : ...]      of w_qkv   (bf16)
    # woT_ref: (Hd, D)     rows [h*Hd:(h+1)*Hd]        of w_out.T (bf16)
    # b_ref:   (1, D)      output-projection bias (f32)
    # o_ref:   (1, N, D)   final output for batch element b
    # acc_ref: (N, D) f32  cross-head accumulator (VMEM scratch)
    h = pl.program_id(1)

    @pl.when(h == 0)
    def _():
        acc_ref[...] = jnp.zeros_like(acc_ref)

    x = x_ref[0].astype(jnp.bfloat16)                         # (N, D) bf16 for MXU
    scale = 1.0 / math.sqrt(head_dim)

    # --- per-head Q/K/V projection: contract over D (dim 1 of both operands)
    dn_t = (((1,), (1,)), ((), ()))                           # x @ W^T
    q = lax.dot_general(x, wq_ref[...], dn_t,
                        preferred_element_type=jnp.float32) * scale   # (N, Hd)
    k = lax.dot_general(x, wk_ref[...], dn_t,
                        preferred_element_type=jnp.float32)           # (N, Hd)
    v = lax.dot_general(x, wv_ref[...], dn_t,
                        preferred_element_type=jnp.float32)           # (N, Hd)

    # --- scores (N, N): contract over Hd (bf16 operands, f32 accumulate)
    s = lax.dot_general(q.astype(jnp.bfloat16), k.astype(jnp.bfloat16),
                        dimension_numbers=(((1,), (1,)), ((), ())),
                        preferred_element_type=jnp.float32)           # (N, N) f32

    # --- causal mask: single (N, N) iota pair, finite f32 fill (is_causal=True
    #     guarantees no fully-masked row).
    N = s.shape[0]
    row = lax.broadcasted_iota(jnp.int32, (N, N), 0)
    col = lax.broadcasted_iota(jnp.int32, (N, N), 1)
    s = jnp.where(col <= row, s, -1e30)

    # --- softmax (kept in f32)
    m = jnp.max(s, axis=-1, keepdims=True)
    p = jnp.exp(s - m)                                        # (N, N) f32
    l = jnp.sum(p, axis=-1, keepdims=True)                    # (N, 1) f32

    # --- PV: bf16 operands, f32 accumulate; normalize the small accumulator
    o = lax.dot_general(p.astype(jnp.bfloat16), v.astype(jnp.bfloat16),
                        dimension_numbers=(((1,), (0,)), ((), ())),
                        preferred_element_type=jnp.float32)           # (N, Hd)
    o = o * pl.reciprocal(l, approx=False)

    # --- this head's slice of the output projection: (N, Hd) @ (Hd, D) -> (N, D)
    contrib = lax.dot_general(o.astype(jnp.bfloat16), woT_ref[...],
                              dimension_numbers=(((1,), (0,)), ((), ())),
                              preferred_element_type=jnp.float32)
    acc_ref[...] += contrib

    @pl.when(h == pl.num_programs(1) - 1)
    def _():
        out = acc_ref[...] + b_ref[...].astype(jnp.float32)   # (N,D) + (1,D)
        o_ref[0] = out.astype(o_ref.dtype)


# ----------------------------- wrapper ---------------------------------------

@functools.partial(jax.jit, static_argnames=("heads",))
def attention_base_forward(x, w_qkv, w_out, b_out, *, heads):
    """Pallas implementation of AttentionBase.forward (returns outputs[0]).

    x:      (B, N, D)
    w_qkv:  (3D, D)  -- nn.Linear(dim, 3*dim, bias=False).weight
    w_out:  (D, D)   -- nn.Linear(dim, dim).weight
    b_out:  (D,)     -- nn.Linear(dim, dim).bias
    """
    B, N, D = x.shape
    H = heads
    Hd = D // H
    dtype = x.dtype

    # Layout plumbing outside the kernel (one-time, tiny):
    #   * weights in bf16 -> native MXU path, halves weight DMA + VMEM residency
    #   * w_out transposed so each head's slice is a sublane-aligned (Hd, D) block
    w_qkv_b = w_qkv.astype(jnp.bfloat16)
    w_outT_b = w_out.T.astype(jnp.bfloat16)
    b_out_2d = b_out.reshape(1, D).astype(jnp.float32)

    kernel = functools.partial(_attn_head_kernel, head_dim=Hd)

    out = pl.pallas_call(
        kernel,
        out_shape=jax.ShapeDtypeStruct((B, N, D), dtype),
        grid_spec=pltpu.PrefetchScalarGridSpec(
            num_scalar_prefetch=0,
            grid=(B, H),
            in_specs=[
                # x stays resident across the whole head loop for a given b.
                pl.BlockSpec((1, N, D), lambda b, h: (b, 0, 0)),
                # Per-head weight row blocks (head selection done by the DMA).
                pl.BlockSpec((Hd, D), lambda b, h: (h, 0)),           # Q rows
                pl.BlockSpec((Hd, D), lambda b, h: (h + H, 0)),       # K rows
                pl.BlockSpec((Hd, D), lambda b, h: (h + 2 * H, 0)),   # V rows
                pl.BlockSpec((Hd, D), lambda b, h: (h, 0)),           # w_out.T rows
                pl.BlockSpec((1, D), lambda b, h: (0, 0)),            # bias
            ],
            out_specs=pl.BlockSpec((1, N, D), lambda b, h: (b, 0, 0)),
            scratch_shapes=[pltpu.VMEM((N, D), jnp.float32)],
        ),
        compiler_params=pltpu.CompilerParams(
            dimension_semantics=("parallel", "arbitrary"),
            vmem_limit_bytes=48 * 1024 * 1024,
        ),
    )(x, w_qkv_b, w_qkv_b, w_qkv_b, w_outT_b, b_out_2d)
    return out


# ----------------------------- reference (pure JAX, f32) -----------------------

def attention_base_reference(x, w_qkv, w_out, b_out, heads):
    B, N, D = x.shape
    H = heads
    Hd = D // H
    qkv = x @ w_qkv.T
    q, k, v = jnp.split(qkv, 3, axis=-1)

    def split_heads(t):
        return t.reshape(B, N, H, Hd).transpose(0, 2, 1, 3)

    q, k, v = split_heads(q), split_heads(k), split_heads(v)
    s = jnp.einsum("bhqd,bhkd->bhqk", q, k) / math.sqrt(Hd)
    mask = jnp.tril(jnp.ones((N, N), dtype=bool))
    s = jnp.where(mask, s, -jnp.inf)
    p = jax.nn.softmax(s, axis=-1)
    o = jnp.einsum("bhqk,bhkd->bhqd", p, v)
    o = o.transpose(0, 2, 1, 3).reshape(B, N, D)
    return o @ w_out.T + b_out


# ----------------------------- main -------------------------------------------

if __name__ == "__main__":
    # Small, deterministic shapes.  NOTE: perf conclusions require N >= 512;
    # this harness is a correctness check only.
    B, N, D, H = 2, 16, 128, 8   # D % H == 0

    key = jax.random.PRNGKey(0)
    kx, kqkv, kwo, kbo = jax.random.split(key, 4)

    x = jax.random.normal(kx, (B, N, D), dtype=jnp.float32)
    w_qkv = 0.02 * jax.random.normal(kqkv, (3 * D, D), dtype=jnp.float32)
    w_out = 0.02 * jax.random.normal(kwo, (D, D), dtype=jnp.float32)
    b_out = 0.02 * jax.random.normal(kbo, (D,), dtype=jnp.float32)

    out = attention_base_forward(x, w_qkv, w_out, b_out, heads=H)
    out = jax.block_until_ready(out)

    ref = attention_base_reference(x, w_qkv, w_out, b_out, H)
    assert out.shape == (B, N, D)
    # Tolerance accounts for bf16 MXU operands (weights/activations); softmax
    # numerics and accumulation stay f32.
    assert jnp.allclose(out, ref, rtol=1e-2, atol=1e-2), "mismatch vs reference"

    print("KERNEL_OK")
</pallas_src>

<mosaic_0001>
module attributes {stable_mosaic.version = 11 : i64} {
  func.func @_attn_head_kernel(%arg0: i32, %arg1: i32, %arg2: memref<1x16x128xf32, #tpu.memory_space<vmem>>, %arg3: memref<16x128xbf16, #tpu.memory_space<vmem>>, %arg4: memref<16x128xbf16, #tpu.memory_space<vmem>>, %arg5: memref<16x128xbf16, #tpu.memory_space<vmem>>, %arg6: memref<16x128xbf16, #tpu.memory_space<vmem>>, %arg7: memref<1x128xf32, #tpu.memory_space<vmem>>, %arg8: memref<1x16x128xf32, #tpu.memory_space<vmem>>, %arg9: memref<16x128xf32, #tpu.memory_space<vmem>>) attributes {dimension_semantics = [#tpu.dimension_semantics<parallel>, #tpu.dimension_semantics<arbitrary>], iteration_bounds = array<i64: 2, 8>, scalar_prefetch = 0 : i64, scratch_operands = 1 : i64, tpu.core_type = #tpu.core_type<tc>, window_params = [{transform_indices = @transform_0, window_bounds = array<i64: 1, 16, 128>}, {transform_indices = @transform_1, window_bounds = array<i64: 16, 128>}, {transform_indices = @transform_2, window_bounds = array<i64: 16, 128>}, {transform_indices = @transform_3, window_bounds = array<i64: 16, 128>}, {transform_indices = @transform_4, window_bounds = array<i64: 16, 128>}, {pipeline_mode = #tpu.pipeline_mode<synchronous>, transform_indices = @transform_5, window_bounds = array<i64: 1, 128>}, {transform_indices = @transform_6, window_bounds = array<i64: 1, 16, 128>}]} {
    %c0_i32 = arith.constant 0 : i32
    %0 = arith.cmpi eq, %arg1, %c0_i32 : i32
    %1 = arith.extui %0 : i1 to i32
    %c0_i32_0 = arith.constant 0 : i32
    %2 = arith.cmpi ne, %1, %c0_i32_0 : i32
    scf.if %2 {
      %cst_25 = arith.constant 0.000000e+00 : f32
      %44 = vector.broadcast %cst_25 : f32 to vector<16x128xf32>
      %c0_26 = arith.constant 0 : index
      %c0_27 = arith.constant 0 : index
      %45 = vector.load %arg9[%c0_26, %c0_27] : memref<16x128xf32, #tpu.memory_space<vmem>>, vector<16x128xf32>
      tpu.vector_store %arg9[%c0_26, %c0_27], %44 {strides = array<i32>} : memref<16x128xf32, #tpu.memory_space<vmem>>, vector<16x128xf32>,
    } else {
    }
    %c0 = arith.constant 0 : index
    %c0_1 = arith.constant 0 : index
    %c0_2 = arith.constant 0 : index
    %3 = vector.load %arg2[%c0, %c0_1, %c0_2] : memref<1x16x128xf32, #tpu.memory_space<vmem>>, vector<1x16x128xf32>
    %4 = vector.shape_cast %3 : vector<1x16x128xf32> to vector<16x128xf32>
    %5 = arith.truncf %4 : vector<16x128xf32> to vector<16x128xbf16>
    %c0_3 = arith.constant 0 : index
    %c0_4 = arith.constant 0 : index
    %6 = vector.load %arg3[%c0_3, %c0_4] : memref<16x128xbf16, #tpu.memory_space<vmem>>, vector<16x128xbf16>
    %cst = arith.constant dense<0.000000e+00> : vector<16x16xf32>
    %7 = tpu.matmul %5, %6, %cst {dimension_numbers = #tpu.dot_dimension_numbers<[1], [1], [0], [0], [0, 0, 1, 0], [], []>} : vector<16x128xbf16>, vector<16x128xbf16>, vector<16x16xf32> -> vector<16x16xf32>
    %cst_5 = arith.constant 2.500000e-01 : f32
    %8 = vector.broadcast %cst_5 : f32 to vector<16x16xf32>
    %9 = arith.mulf %7, %8 : vector<16x16xf32>
    %c0_6 = arith.constant 0 : index
    %c0_7 = arith.constant 0 : index
    %10 = vector.load %arg4[%c0_6, %c0_7] : memref<16x128xbf16, #tpu.memory_space<vmem>>, vector<16x128xbf16>
    %cst_8 = arith.constant dense<0.000000e+00> : vector<16x16xf32>
    %11 = tpu.matmul %5, %10, %cst_8 {dimension_numbers = #tpu.dot_dimension_numbers<[1], [1], [0], [0], [0, 0, 1, 0], [], []>} : vector<16x128xbf16>, vector<16x128xbf16>, vector<16x16xf32> -> vector<16x16xf32>
    %c0_9 = arith.constant 0 : index
    %c0_10 = arith.constant 0 : index
    %12 = vector.load %arg5[%c0_9, %c0_10] : memref<16x128xbf16, #tpu.memory_space<vmem>>, vector<16x128xbf16>
    %cst_11 = arith.constant dense<0.000000e+00> : vector<16x16xf32>
    %13 = tpu.matmul %5, %12, %cst_11 {dimension_numbers = #tpu.dot_dimension_numbers<[1], [1], [0], [0], [0, 0, 1, 0], [], []>} : vector<16x128xbf16>, vector<16x128xbf16>, vector<16x16xf32> -> vector<16x16xf32>
    %14 = arith.truncf %9 : vector<16x16xf32> to vector<16x16xbf16>
    %15 = arith.truncf %11 : vector<16x16xf32> to vector<16x16xbf16>
    %cst_12 = arith.constant dense<0.000000e+00> : vector<16x16xf32>
    %16 = tpu.matmul %14, %15, %cst_12 {dimension_numbers = #tpu.dot_dimension_numbers<[1], [1], [0], [0], [0, 0, 1, 0], [], []>} : vector<16x16xbf16>, vector<16x16xbf16>, vector<16x16xf32> -> vector<16x16xf32>
    %17 = tpu.iota {dimensions = array<i32: 0>} : vector<16x16xi32>
    %18 = tpu.iota {dimensions = array<i32: 1>} : vector<16x16xi32>
    %19 = arith.cmpi sle, %18, %17 : vector<16x16xi32>
    %cst_13 = arith.constant -1.000000e+30 : f32
    %20 = vector.broadcast %cst_13 : f32 to vector<16x16xf32>
    %21 = arith.select %19, %16, %20 : vector<16x16xi1>, vector<16x16xf32>
    %cst_14 = arith.constant dense<0xFF800000> : vector<16xf32>
    %22 = vector.multi_reduction <maximumf>, %21, %cst_14 [1] : vector<16x16xf32> to vector<16xf32>
    %23 = vector.shape_cast %22 : vector<16xf32> to vector<16x1xf32>
    %24 = vector.broadcast %23 : vector<16x1xf32> to vector<16x16xf32>
    %25 = arith.subf %21, %24 : vector<16x16xf32>
    %26 = math.exp %25 : vector<16x16xf32>
    %cst_15 = arith.constant dense<0.000000e+00> : vector<16xf32>
    %27 = vector.multi_reduction <add>, %26, %cst_15 [1] : vector<16x16xf32> to vector<16xf32>
    %28 = vector.shape_cast %27 : vector<16xf32> to vector<16x1xf32>
    %29 = arith.truncf %26 : vector<16x16xf32> to vector<16x16xbf16>
    %30 = arith.truncf %13 : vector<16x16xf32> to vector<16x16xbf16>
    %cst_16 = arith.constant dense<0.000000e+00> : vector<16x16xf32>
    %31 = tpu.matmul %29, %30, %cst_16 {dimension_numbers = #tpu.dot_dimension_numbers<[1], [0], [0], [1], [0, 0, 1, 1], [], []>} : vector<16x16xbf16>, vector<16x16xbf16>, vector<16x16xf32> -> vector<16x16xf32>
    %32 = tpu.reciprocal %28 : vector<16x1xf32> -> vector<16x1xf32>
    %33 = vector.broadcast %32 : vector<16x1xf32> to vector<16x16xf32>
    %34 = arith.mulf %31, %33 : vector<16x16xf32>
    %35 = arith.truncf %34 : vector<16x16xf32> to vector<16x16xbf16>
    %c0_17 = arith.constant 0 : index
    %c0_18 = arith.constant 0 : index
    %36 = vector.load %arg6[%c0_17, %c0_18] : memref<16x128xbf16, #tpu.memory_space<vmem>>, vector<16x128xbf16>
    %cst_19 = arith.constant dense<0.000000e+00> : vector<16x128xf32>
    %37 = tpu.matmul %35, %36, %cst_19 {dimension_numbers = #tpu.dot_dimension_numbers<[1], [0], [0], [1], [0, 0, 1, 1], [], []>} : vector<16x16xbf16>, vector<16x128xbf16>, vector<16x128xf32> -> vector<16x128xf32>
    %c0_20 = arith.constant 0 : index
    %c0_21 = arith.constant 0 : index
    %38 = vector.load %arg9[%c0_20, %c0_21] : memref<16x128xf32, #tpu.memory_space<vmem>>, vector<16x128xf32>
    %39 = arith.addf %38, %37 : vector<16x128xf32>
    %c0_22 = arith.constant 0 : index
    %c0_23 = arith.constant 0 : index
    %40 = vector.load %arg9[%c0_22, %c0_23] : memref<16x128xf32, #tpu.memory_space<vmem>>, vector<16x128xf32>
    tpu.vector_store %arg9[%c0_22, %c0_23], %39 {strides = array<i32>} : memref<16x128xf32, #tpu.memory_space<vmem>>, vector<16x128xf32>,
    %c7_i32 = arith.constant 7 : i32
    %41 = arith.cmpi eq, %arg1, %c7_i32 : i32
    %42 = arith.extui %41 : i1 to i32
    %c0_i32_24 = arith.constant 0 : i32
    %43 = arith.cmpi ne, %42, %c0_i32_24 : i32
    scf.if %43 {
      %c0_25 = arith.constant 0 : index
      %c0_26 = arith.constant 0 : index
      %44 = vector.load %arg9[%c0_25, %c0_26] : memref<16x128xf32, #tpu.memory_space<vmem>>, vector<16x128xf32>
      %c0_27 = arith.constant 0 : index
      %c0_28 = arith.constant 0 : index
      %45 = vector.load %arg7[%c0_27, %c0_28] : memref<1x128xf32, #tpu.memory_space<vmem>>, vector<1x128xf32>
      %46 = vector.broadcast %45 : vector<1x128xf32> to vector<16x128xf32>
      %47 = arith.addf %44, %46 : vector<16x128xf32>
      %c0_29 = arith.constant 0 : index
      %c0_30 = arith.constant 0 : index
      %c0_31 = arith.constant 0 : index
      %48 = vector.load %arg8[%c0_29, %c0_30, %c0_31] : memref<1x16x128xf32, #tpu.memory_space<vmem>>, vector<1x16x128xf32>
      %49 = vector.shape_cast %48 : vector<1x16x128xf32> to vector<16x128xf32>
      %50 = vector.shape_cast %47 : vector<16x128xf32> to vector<1x16x128xf32>
      tpu.vector_store %arg8[%c0_29, %c0_30, %c0_31], %50 {strides = array<i32>} : memref<1x16x128xf32, #tpu.memory_space<vmem>>, vector<1x16x128xf32>,
    } else {
    }
    return
  }
  func.func @transform_0(%arg0: i32, %arg1: i32) -> (i32, i32, i32) {
    %c0_i32 = arith.constant 0 : i32
    %c0_i32_0 = arith.constant 0 : i32
    %c0_i32_1 = arith.constant 0 : i32
    return %arg0, %c0_i32, %c0_i32_0 : i32, i32, i32
  }
  func.func @transform_1(%arg0: i32, %arg1: i32) -> (i32, i32) {
    %c0_i32 = arith.constant 0 : i32
    %c0_i32_0 = arith.constant 0 : i32
    return %arg1, %c0_i32 : i32, i32
  }
  func.func @transform_2(%arg0: i32, %arg1: i32) -> (i32, i32) {
    %c8_i32 = arith.constant 8 : i32
    %0 = arith.addi %arg1, %c8_i32 : i32
    %c0_i32 = arith.constant 0 : i32
    %c0_i32_0 = arith.constant 0 : i32
    return %0, %c0_i32 : i32, i32
  }
  func.func @transform_3(%arg0: i32, %arg1: i32) -> (i32, i32) {
    %c16_i32 = arith.constant 16 : i32
    %0 = arith.addi %arg1, %c16_i32 : i32
    %c0_i32 = arith.constant 0 : i32
    %c0_i32_0 = arith.constant 0 : i32
    return %0, %c0_i32 : i32, i32
  }
  func.func @transform_4(%arg0: i32, %arg1: i32) -> (i32, i32) {
    %c0_i32 = arith.constant 0 : i32
    %c0_i32_0 = arith.constant 0 : i32
    return %arg1, %c0_i32 : i32, i32
  }
  func.func @transform_5(%arg0: i32, %arg1: i32) -> (i32, i32) {
    %c0_i32 = arith.constant 0 : i32
    %c0_i32_0 = arith.constant 0 : i32
    %c0_i32_1 = arith.constant 0 : i32
    return %c0_i32, %c0_i32_0 : i32, i32
  }
  func.func @transform_6(%arg0: i32, %arg1: i32) -> (i32, i32, i32) {
    %c0_i32 = arith.constant 0 : i32
    %c0_i32_0 = arith.constant 0 : i32
    %c0_i32_1 = arith.constant 0 : i32
    return %arg0, %c0_i32, %c0_i32_0 : i32, i32, i32
  }
}

</mosaic_0001>

<llo_original>
// kernel: attention_base_forward.1
$region0: #{attention_base_forward.1}
  #allocation0 [shape = 'u32[]', space=smem, size = 0x4, offset = 0x4, fixed_abs, tag = 'smem constant byte address 0x4 - core index']
  #allocation1 [shape = 'u32[144,128]{1,0:T(1,128)}', space=vmem, size = 0x12000, scoped, tag = 'internal scratch']
  #allocation2 [shape = 'f32[16,128]{1,0:T(8,128)}', space=vmem, size = 0x2000, scoped, tag = 'scratch operand']
  %s0 = inlined_call_operand.vmem [shape: f32[2,16,128], index: 0, kind: input, shape index: {}]
  %s1 = inlined_call_operand.vmem [shape: bf16[384,128], index: 1, kind: input, shape index: {}, may-alias: {1,2,3}]
  %s2 = inlined_call_operand.vmem [shape: bf16[384,128], index: 2, kind: input, shape index: {}, may-alias: {1,2,3}]
  %s3 = inlined_call_operand.vmem [shape: bf16[384,128], index: 3, kind: input, shape index: {}, may-alias: {1,2,3}]
  %s4 = inlined_call_operand.vmem [shape: bf16[128,128], index: 4, kind: input, shape index: {}]
  %s5 = inlined_call_operand.vmem [shape: f32[1,128], index: 5, kind: input, shape index: {}]
  %s6 = inlined_call_operand.hbm [shape: f32[2,16,128], index: 6, kind: output, shape index: {}]
  %s7 = sld [smem:[#allocation0]]
  $region65: #{attention_base_forward.1} parent=0
    _
  %s9 = ssub.s32 1, %s7
  %s10 = scalar_select 0, %s9, %s7
  $region1: #{attention_base_forward.1} parent=0
    #allocation3 [shape = 'u8[16384]{0}', space=vmem, size = 0x4000, scoped, tag = 'output window, operand 0']
    #allocation4 [shape = 's32[2]{0}', space=sflag, size = 0x8, scoped, tag = 'scoped memory for attention_base_forward.1']
    %11 = vsyncpa [#allocation4], 0
    %s12 = scalar_lea.sflag [#allocation4], 1
    %13 = vsyncpa %s12, 0
    loop: start=0, step=1, limit=18
    $region2: #{attention_base_forward.1} parent=1 // loop_pre_header
      _
    $region3: #{attention_base_forward.1} parent=1 // loop_header
      %s15 = sphi 0, %s19
      %p16 = scmp.ge.s32.totalorder %s15, 18
      %s22 = sphi 0, %s34
      %s23 = sphi 0, %s30
      %s24 = sphi 0, %s22
      %s25 = sphi 0, %s23
      %s26 = sphi 0, %s24
      %s27 = sphi 0, %s25
      %s37 = sphi 0, %s39
      %s40 = sphi 0, %s37
      %s41 = sphi 0, %s40
      %s57 = sphi 0, %s41
      %s63 = sphi 0, %s65
      %s66 = sphi 0, %s63
      %s67 = sphi 0, %s66
      %s83 = sphi 0, %s67
      %s91 = sphi 0, %s93
      %s94 = sphi 0, %s91
      %s95 = sphi 0, %s94
      %s111 = sphi 0, %s95
      %s119 = sphi 0, %s121
      %s122 = sphi 0, %s119
      %s123 = sphi 0, %s122
      %s139 = sphi 0, %s123
      %s145 = sphi 0, %s147
      %s148 = sphi 0, %s145
      %s149 = sphi 0, %s148
      %s165 = sphi 0, %s149
      %s169 = sphi 0, %s169
      %s171 = sphi 0, %s169
      %s172 = sphi 0, %s171
      %s186 = sphi 0, %s172
      %s192 = sphi 0, %s194
      %s195 = sphi 0, %s192
      %s196 = sphi 0, %s195
      %s212 = sphi 0, %s196
    $region4: #{attention_base_forward.1} parent=1 // loop_header_branch
      %18 = sbr.rel (%p16) target = $region8
    $region5: #{attention_base_forward.1} parent=1 // loop_body
      %s20 = ssub.s32 %s15, 1
      %s21 = ssub.s32 %s15, 2
      %s28 = sadd.s32 1, %s23
      %p29 = scmp.ge.s32.totalorder %s28, 8
      %s30 = scalar_select %p29, 0, %s28
      %s31 = sadd.s32 1, %s22
      %s32 = scalar_select %p29, %s31, %s22
      %p33 = scmp.ge.s32.totalorder %s32, 2
      %s34 = scalar_select %p33, 0, %s32
      %s35 = ssub.s32 %s22, %s34
      %p36 = scmp.eq.s32.totalorder %s35, 0
      %s38 = sadd.s32 %s37, 1
      %s39 = scalar_select %p36, %s37, %s38
      %p42 = pneg %p36
      %p43 = scmp.eq.s32.totalorder %s15, 15
      %p44 = por %p42, %p43
      %p45 = scmp.ne.s32.totalorder %s37, %s40
      %p46 = scmp.eq.s32.totalorder %s15, 0
      %p47 = por %p45, %p46
      %p48 = scmp.ne.s32.totalorder %s37, %s40
      %p49 = scmp.eq.s32.totalorder %s20, 15
      %p50 = por %p48, %p49
      %p51 = scmp.ne.s32.totalorder %s40, %s41
      %p52 = scmp.eq.s32.totalorder %s20, 0
      %p53 = por %p51, %p52
      %p54 = scmp.ne.s32.totalorder %s40, %s41
      %p55 = scmp.eq.s32.totalorder %s21, 15
      %p56 = por %p54, %p55
      %p58 = scmp.ne.s32.totalorder %s41, %s57
      %p59 = scmp.eq.s32.totalorder %s21, 0
      %p60 = por %p58, %p59
      %s61 = ssub.s32 %s23, %s30
      %p62 = scmp.eq.s32.totalorder %s61, 0
      %s64 = sadd.s32 %s63, 1
      %s65 = scalar_select %p62, %s63, %s64
      %p68 = pneg %p62
      %p69 = scmp.eq.s32.totalorder %s15, 15
      %p70 = por %p68, %p69
      %p71 = scmp.ne.s32.totalorder %s63, %s66
      %p72 = scmp.eq.s32.totalorder %s15, 0
      %p73 = por %p71, %p72
      %p74 = scmp.ne.s32.totalorder %s63, %s66
      %p75 = scmp.eq.s32.totalorder %s20, 15
      %p76 = por %p74, %p75
      %p77 = scmp.ne.s32.totalorder %s66, %s67
      %p78 = scmp.eq.s32.totalorder %s20, 0
      %p79 = por %p77, %p78
      %p80 = scmp.ne.s32.totalorder %s66, %s67
      %p81 = scmp.eq.s32.totalorder %s21, 15
      %p82 = por %p80, %p81
      %p84 = scmp.ne.s32.totalorder %s67, %s83
      %p85 = scmp.eq.s32.totalorder %s21, 0
      %p86 = por %p84, %p85
      %s87 = sadd.s32 %s23, 8
      %s88 = sadd.s32 %s30, 8
      %s89 = ssub.s32 %s87, %s88
      %p90 = scmp.eq.s32.totalorder %s89, 0
      %s92 = sadd.s32 %s91, 1
      %s93 = scalar_select %p90, %s91, %s92
      %p96 = pneg %p90
      %p97 = scmp.eq.s32.totalorder %s15, 15
      %p98 = por %p96, %p97
      %p99 = scmp.ne.s32.totalorder %s91, %s94
      %p100 = scmp.eq.s32.totalorder %s15, 0
      %p101 = por %p99, %p100
      %p102 = scmp.ne.s32.totalorder %s91, %s94
      %p103 = scmp.eq.s32.totalorder %s20, 15
      %p104 = por %p102, %p103
      %p105 = scmp.ne.s32.totalorder %s94, %s95
      %p106 = scmp.eq.s32.totalorder %s20, 0
      %p107 = por %p105, %p106
      %p108 = scmp.ne.s32.totalorder %s94, %s95
      %p109 = scmp.eq.s32.totalorder %s21, 15
      %p110 = por %p108, %p109
      %p112 = scmp.ne.s32.totalorder %s95, %s111
      %p113 = scmp.eq.s32.totalorder %s21, 0
      %p114 = por %p112, %p113
      %s115 = sadd.s32 %s23, 16
      %s116 = sadd.s32 %s30, 16
      %s117 = ssub.s32 %s115, %s116
      %p118 = scmp.eq.s32.totalorder %s117, 0
      %s120 = sadd.s32 %s119, 1
      %s121 = scalar_select %p118, %s119, %s120
      %p124 = pneg %p118
      %p125 = scmp.eq.s32.totalorder %s15, 15
      %p126 = por %p124, %p125
      %p127 = scmp.ne.s32.totalorder %s119, %s122
      %p128 = scmp.eq.s32.totalorder %s15, 0
      %p129 = por %p127, %p128
      %p130 = scmp.ne.s32.totalorder %s119, %s122
      %p131 = scmp.eq.s32.totalorder %s20, 15
      %p132 = por %p130, %p131
      %p133 = scmp.ne.s32.totalorder %s122, %s123
      %p134 = scmp.eq.s32.totalorder %s20, 0
      %p135 = por %p133, %p134
      %p136 = scmp.ne.s32.totalorder %s122, %s123
      %p137 = scmp.eq.s32.totalorder %s21, 15
      %p138 = por %p136, %p137
      %p140 = scmp.ne.s32.totalorder %s123, %s139
      %p141 = scmp.eq.s32.totalorder %s21, 0
      %p142 = por %p140, %p141
      %s143 = ssub.s32 %s23, %s30
      %p144 = scmp.eq.s32.totalorder %s143, 0
      %s146 = sadd.s32 %s145, 1
      %s147 = scalar_select %p144, %s145, %s146
      %p150 = pneg %p144
      %p151 = scmp.eq.s32.totalorder %s15, 15
      %p152 = por %p150, %p151
      %p153 = scmp.ne.s32.totalorder %s145, %s148
      %p154 = scmp.eq.s32.totalorder %s15, 0
      %p155 = por %p153, %p154
      %p156 = scmp.ne.s32.totalorder %s145, %s148
      %p157 = scmp.eq.s32.totalorder %s20, 15
      %p158 = por %p156, %p157
      %p159 = scmp.ne.s32.totalorder %s148, %s149
      %p160 = scmp.eq.s32.totalorder %s20, 0
      %p161 = por %p159, %p160
      %p162 = scmp.ne.s32.totalorder %s148, %s149
      %p163 = scmp.eq.s32.totalorder %s21, 15
      %p164 = por %p162, %p163
      %p166 = scmp.ne.s32.totalorder %s149, %s165
      %p167 = scmp.eq.s32.totalorder %s21, 0
      %p168 = por %p166, %p167
      %s170 = sadd.s32 %s169, 1
      %p173 = scmp.eq.s32.totalorder %s15, 15
      %p174 = scmp.ne.s32.totalorder %s169, %s171
      %p175 = scmp.eq.s32.totalorder %s15, 0
      %p176 = por %p174, %p175
      %p177 = scmp.ne.s32.totalorder %s169, %s171
      %p178 = scmp.eq.s32.totalorder %s20, 15
      %p179 = por %p177, %p178
      %p180 = scmp.ne.s32.totalorder %s171, %s172
      %p181 = scmp.eq.s32.totalorder %s20, 0
      %p182 = por %p180, %p181
      %p183 = scmp.ne.s32.totalorder %s171, %s172
      %p184 = scmp.eq.s32.totalorder %s21, 15
      %p185 = por %p183, %p184
      %p187 = scmp.ne.s32.totalorder %s172, %s186
      %p188 = scmp.eq.s32.totalorder %s21, 0
      %p189 = por %p187, %p188
      %s190 = ssub.s32 %s22, %s34
      %p191 = scmp.eq.s32.totalorder %s190, 0
      %s193 = sadd.s32 %s192, 1
      %s194 = scalar_select %p191, %s192, %s193
      %p197 = pneg %p191
      %p198 = scmp.eq.s32.totalorder %s15, 15
      %p199 = por %p197, %p198
      %p200 = scmp.ne.s32.totalorder %s192, %s195
      %p201 = scmp.eq.s32.totalorder %s15, 0
      %p202 = por %p200, %p201
      %p203 = scmp.ne.s32.totalorder %s192, %s195
      %p204 = scmp.eq.s32.totalorder %s20, 15
      %p205 = por %p203, %p204
      %p206 = scmp.ne.s32.totalorder %s195, %s196
      %p207 = scmp.eq.s32.totalorder %s20, 0
      %p208 = por %p206, %p207
      %p209 = scmp.ne.s32.totalorder %s195, %s196
      %p210 = scmp.eq.s32.totalorder %s21, 15
      %p211 = por %p209, %p210
      %p213 = scmp.ne.s32.totalorder %s196, %s212
      %p214 = scmp.eq.s32.totalorder %s21, 0
      %p215 = por %p213, %p214
      %p216 = scmp.le.s32.totalorder 1, %s15
      %p217 = scmp.lt.s32.totalorder %s15, 17
      %p218 = pnand %p216, %p217
      %p219 = pneg %p218
      // Predicated region
      $region9: #{attention_base_forward.1} parent=5 // pred_check
        _
      $region10: #{attention_base_forward.1} parent=5 // pred_check_branch
        %221 = sbr.rel (%p218) target = $region12
      $region11: #{attention_base_forward.1} parent=5 // pred_region
        %s222 = ssub.s32 %s15, 1
        // Predicated region
        $region13: #{attention_base_forward.1} parent=11 // pred_check
          %p223 = pneg %p182
        $region14: #{attention_base_forward.1} parent=11 // pred_check_branch
          %225 = sbr.rel (%p223) target = $region16
        $region15: #{attention_base_forward.1} parent=11 // pred_region
          _
        $region16: #{attention_base_forward.1} parent=11 // pred_fallthru
          _
      $region12: #{attention_base_forward.1} parent=5 // pred_fallthru
        _
      %p226 = scmp.lt.s32.totalorder %s15, 16
      // Predicated region
      $region17: #{attention_base_forward.1} parent=5 // pred_check
        %p227 = pneg %p226
      $region18: #{attention_base_forward.1} parent=5 // pred_check_branch
        %229 = sbr.rel (%p227) target = $region20
      $region19: #{attention_base_forward.1} parent=5 // pred_region
        // Predicated region
        $region21: #{attention_base_forward.1} parent=19 // pred_check
          %p230 = pneg %p47
        $region22: #{attention_base_forward.1} parent=19 // pred_check_branch
          %232 = sbr.rel (%p230) target = $region24
        $region23: #{attention_base_forward.1} parent=19 // pred_region
          %p233 = scmp.lt.s32.totalorder %s22, 1
          %s234 = scalar_select %p233, %s22, 1
          %s235 = smul.addr %s234, 2
          %s236 = smul.addr %s235, 8
          %s237 = scalar_lea.vmem %s0, %s236
        $region24: #{attention_base_forward.1} parent=19 // pred_fallthru
          _
        // Predicated region
        $region25: #{attention_base_forward.1} parent=19 // pred_check
          %p238 = pneg %p73
        $region26: #{attention_base_forward.1} parent=19 // pred_check_branch
          %240 = sbr.rel (%p238) target = $region28
        $region27: #{attention_base_forward.1} parent=19 // pred_region
          %s241 = smul.u32 2, %s23
          %p242 = scmp.lt.s32.totalorder %s241, 47
          %s243 = scalar_select %p242, %s241, 47
          %s244 = smul.addr %s243, 4
          %s245 = scalar_lea.vmem %s1, %s244
          %s246 = smul.u32 2, %s23
        $region28: #{attention_base_forward.1} parent=19 // pred_fallthru
          _
        // Predicated region
        $region29: #{attention_base_forward.1} parent=19 // pred_check
          %p247 = pneg %p101
        $region30: #{attention_base_forward.1} parent=19 // pred_check_branch
          %249 = sbr.rel (%p247) target = $region32
        $region31: #{attention_base_forward.1} parent=19 // pred_region
          %s250 = sadd.s32 %s23, 8
          %s251 = smul.u32 2, %s250
          %p252 = scmp.lt.s32.totalorder %s251, 47
          %s253 = scalar_select %p252, %s251, 47
          %s254 = smul.addr %s253, 4
          %s255 = scalar_lea.vmem %s2, %s254
          %s256 = sadd.s32 %s23, 8
          %s257 = smul.u32 2, %s256
        $region32: #{attention_base_forward.1} parent=19 // pred_fallthru
          _
        // Predicated region
        $region33: #{attention_base_forward.1} parent=19 // pred_check
          %p258 = pneg %p129
        $region34: #{attention_base_forward.1} parent=19 // pred_check_branch
          %260 = sbr.rel (%p258) target = $region36
        $region35: #{attention_base_forward.1} parent=19 // pred_region
          %s261 = sadd.s32 %s23, 16
          %s262 = smul.u32 2, %s261
          %p263 = scmp.lt.s32.totalorder %s262, 47
          %s264 = scalar_select %p263, %s262, 47
          %s265 = smul.addr %s264, 4
          %s266 = scalar_lea.vmem %s3, %s265
          %s267 = sadd.s32 %s23, 16
          %s268 = smul.u32 2, %s267
        $region36: #{attention_base_forward.1} parent=19 // pred_fallthru
          _
        // Predicated region
        $region37: #{attention_base_forward.1} parent=19 // pred_check
          %p269 = pneg %p155
        $region38: #{attention_base_forward.1} parent=19 // pred_check_branch
          %271 = sbr.rel (%p269) target = $region40
        $region39: #{attention_base_forward.1} parent=19 // pred_region
          %s272 = smul.u32 2, %s23
          %p273 = scmp.lt.s32.totalorder %s272, 15
          %s274 = scalar_select %p273, %s272, 15
          %s275 = smul.addr %s274, 4
          %s276 = scalar_lea.vmem %s4, %s275
          %s277 = smul.u32 2, %s23
        $region40: #{attention_base_forward.1} parent=19 // pred_fallthru
          _
      $region20: #{attention_base_forward.1} parent=5 // pred_fallthru
        _
      %p278 = scmp.le.s32.totalorder 1, %s15
      %p279 = scmp.lt.s32.totalorder %s15, 17
      %p280 = pnand %p278, %p279
      %p281 = pneg %p280
      // Predicated region
      $region41: #{attention_base_forward.1} parent=5 // pred_check
        _
      $region42: #{attention_base_forward.1} parent=5 // pred_check_branch
        %283 = sbr.rel (%p280) target = $region44
      $region43: #{attention_base_forward.1} parent=5 // pred_region
        %s284 = ssub.s32 %s15, 1
        %p285 = scmp.lt.s32.totalorder %s24, 1
        %s286 = scalar_select %p285, %s24, 1
        %s287 = smul.addr %s286, 2
        %s288 = smul.addr %s287, 8
        %s289 = scalar_lea.vmem %s0, %s288
        %p290 = pneg %p53
        %p291 = pneg %p50
        %s292 = smul.u32 2, %s25
        %p293 = scmp.lt.s32.totalorder %s292, 47
        %s294 = scalar_select %p293, %s292, 47
        %s295 = smul.addr %s294, 4
        %s296 = scalar_lea.vmem %s1, %s295
        %p297 = pneg %p79
        %p298 = pneg %p76
        %s299 = sadd.s32 %s25, 8
        %s300 = smul.u32 2, %s299
        %p301 = scmp.lt.s32.totalorder %s300, 47
        %s302 = scalar_select %p301, %s300, 47
        %s303 = smul.addr %s302, 4
        %s304 = scalar_lea.vmem %s2, %s303
        %p305 = pneg %p107
        %p306 = pneg %p104
        %s307 = sadd.s32 %s25, 16
        %s308 = smul.u32 2, %s307
        %p309 = scmp.lt.s32.totalorder %s308, 47
        %s310 = scalar_select %p309, %s308, 47
        %s311 = smul.addr %s310, 4
        %s312 = scalar_lea.vmem %s3, %s311
        %p313 = pneg %p135
        %p314 = pneg %p132
        %s315 = smul.u32 2, %s25
        %p316 = scmp.lt.s32.totalorder %s315, 15
        %s317 = scalar_select %p316, %s315, 15
        %s318 = smul.addr %s317, 4
        %s319 = scalar_lea.vmem %s4, %s318
        %p320 = pneg %p161
        %p321 = pneg %p158
        %p322 = pneg %p182
        %p323 = pneg %p179
        %p324 = pneg %p208
        %p325 = pneg %p205
        %s326 = sand.u32 %s195, 1
        %s327 = scalar_lea.sflag [#allocation4], %s326
        %s328 = sand.u32 %s195, 1
        %s329 = smul.addr %s328, 16
        %s330 = scalar_lea.vmem [#allocation3], %s329
        %p331 = scmp.lt.s32.totalorder %s24, 1
        %s332 = scalar_select %p331, %s24, 1
        %s333 = smul.addr %s332, 2
        %s334 = smul.addr %s333, 8
        %s335 = scalar_lea.vmem %s0, %s334
        %s336 = smul.u32 2, %s25
        %p337 = scmp.lt.s32.totalorder %s336, 47
        %s338 = scalar_select %p337, %s336, 47
        %s339 = smul.addr %s338, 4
        %s340 = scalar_lea.vmem %s1, %s339
        %s341 = smul.u32 2, %s25
        %s342 = sadd.s32 %s25, 8
        %s343 = smul.u32 2, %s342
        %p344 = scmp.lt.s32.totalorder %s343, 47
        %s345 = scalar_select %p344, %s343, 47
        %s346 = smul.addr %s345, 4
        %s347 = scalar_lea.vmem %s2, %s346
        %s348 = sadd.s32 %s25, 8
        %s349 = smul.u32 2, %s348
        %s350 = sadd.s32 %s25, 16
        %s351 = smul.u32 2, %s350
        %p352 = scmp.lt.s32.totalorder %s351, 47
        %s353 = scalar_select %p352, %s351, 47
        %s354 = smul.addr %s353, 4
        %s355 = scalar_lea.vmem %s3, %s354
        %s356 = sadd.s32 %s25, 16
        %s357 = smul.u32 2, %s356
        %s358 = smul.u32 2, %s25
        %p359 = scmp.lt.s32.totalorder %s358, 15
        %s360 = scalar_select %p359, %s358, 15
        %s361 = smul.addr %s360, 4
        %s362 = scalar_lea.vmem %s4, %s361
        %s363 = smul.u32 2, %s25
        %p365 = scmp.eq.s32.totalorder %s25, 0
        // Predicated region
        $region45: #{attention_base_forward.1} parent=43 // pred_check
          %p366 = pneg %p365
        $region46: #{attention_base_forward.1} parent=43 // pred_check_branch
          %368 = sbr.rel (%p366) target = $region48
        $region47: #{attention_base_forward.1} parent=43 // pred_region
          %369 = vst [vmem:[#allocation2] sm:$0xff] 0.0
          %370 = vst [vmem:[#allocation2 + $0x8] sm:$0xff] 0.0
        $region48: #{attention_base_forward.1} parent=43 // pred_fallthru
          _
        %v371 = vld [vmem:[%s335] sm:$0xff]
        %v372 = vld [vmem:[%s335 + $0x8] sm:$0xff]
        %v373 = vpack.c.bf16 %v372, %v371
        %v374 = vld [vmem:[%s340] sm:$0xf]
        %v375 = vld [vmem:[%s340 + $0x4] sm:$0xf]
        %v378 = vunpack.c.l.b16 %v374
        %v379 = vunpack.c.l.b16 %v375
        %v380 = vpack.c.b16 %v379, %v378
        %382 = vmatprep.subr.bf16.mxu0 0
        %383 = vmatpush1.bf16.xpose.msra.mxu0 %v380
        %384 = vmatprep.subr.bf16.mxu0 0
        %385 = vmatpush1.bf16.xpose.msra.mxu0 0
        %386 = vmatprep.subr.bf16.mxu0 0
        %387 = vmatpush1.bf16.xpose.msra.mxu0 0
        %388 = vmatprep.subr.bf16.mxu0 0
        %389 = vmatpush1.bf16.xpose.msra.mxu0 0
        %390 = vmatprep.subr.bf16.mxu0 0
        %391 = vmatpush1.bf16.xpose.msra.mxu0 0
        %392 = vmatprep.subr.bf16.mxu0 0
        %393 = vmatpush1.bf16.xpose.msra.mxu0 0
        %394 = vmatprep.subr.bf16.mxu0 0
        %395 = vmatpush1.bf16.xpose.msra.mxu0 0
        %396 = vmatprep.subr.bf16.mxu0 0
        %397 = vmatpush1.bf16.xpose.msra.mxu0 0
        %398 = vmatprep.subr.bf16.mxu0 0
        %399 = vmatpush1.bf16.xpose.msra.mxu0 0
        %400 = vmatprep.subr.bf16.mxu0 0
        %401 = vmatpush1.bf16.xpose.msra.mxu0 0
        %402 = vmatprep.subr.bf16.mxu0 0
        %403 = vmatpush1.bf16.xpose.msra.mxu0 0
        %404 = vmatprep.subr.bf16.mxu0 0
        %405 = vmatpush1.bf16.xpose.msra.mxu0 0
        %406 = vmatprep.subr.bf16.mxu0 0
        %407 = vmatpush1.bf16.xpose.msra.mxu0 0
        %408 = vmatprep.subr.bf16.mxu0 0
        %409 = vmatpush1.bf16.xpose.msra.mxu0 0
        %410 = vmatprep.subr.bf16.mxu0 0
        %411 = vmatpush1.bf16.xpose.msra.mxu0 0
        %412 = vmatprep.subr.bf16.mxu0 0
        %413 = vmatpush1.bf16.xpose.msra.mxu0 0
        %414 = vmatprep.mubr.bf16.mxu0 0
        %415 = vmatmul.mubr.bf16.gmra.mrb[0].mxu0 %v373
        %v416 = vpop.f32.mrb[0].mxu0
        %v417 = vadd.f32 0.0, %v416
        %v418 = vpop.f32.mrb[0].mxu0
        %v419 = vpop.f32.mrb[0].mxu0
        %v420 = vadd.f32 0.0, %v419
        %v421 = vpop.f32.mrb[0].mxu0
        %422 = vdwg.mxu0
        %v423 = vmul.f32 %v417, 0.25
        %v424 = vmul.f32 %v420, 0.25
        %v425 = vld [vmem:[%s347] sm:$0xf]
        %v426 = vld [vmem:[%s347 + $0x4] sm:$0xf]
        %v429 = vunpack.c.l.b16 %v425
        %v430 = vunpack.c.l.b16 %v426
        %v431 = vpack.c.b16 %v430, %v429
        %433 = vmatprep.subr.bf16.mxu0 0
        %434 = vmatpush1.bf16.xpose.msra.mxu0 %v431
        %435 = vmatprep.subr.bf16.mxu0 0
        %436 = vmatpush1.bf16.xpose.msra.mxu0 0
        %437 = vmatprep.subr.bf16.mxu0 0
        %438 = vmatpush1.bf16.xpose.msra.mxu0 0
        %439 = vmatprep.subr.bf16.mxu0 0
        %440 = vmatpush1.bf16.xpose.msra.mxu0 0
        %441 = vmatprep.subr.bf16.mxu0 0
        %442 = vmatpush1.bf16.xpose.msra.mxu0 0
        %443 = vmatprep.subr.bf16.mxu0 0
        %444 = vmatpush1.bf16.xpose.msra.mxu0 0
        %445 = vmatprep.subr.bf16.mxu0 0
        %446 = vmatpush1.bf16.xpose.msra.mxu0 0
        %447 = vmatprep.subr.bf16.mxu0 0
        %448 = vmatpush1.bf16.xpose.msra.mxu0 0
        %449 = vmatprep.subr.bf16.mxu0 0
        %450 = vmatpush1.bf16.xpose.msra.mxu0 0
        %451 = vmatprep.subr.bf16.mxu0 0
        %452 = vmatpush1.bf16.xpose.msra.mxu0 0
        %453 = vmatprep.subr.bf16.mxu0 0
        %454 = vmatpush1.bf16.xpose.msra.mxu0 0
        %455 = vmatprep.subr.bf16.mxu0 0
        %456 = vmatpush1.bf16.xpose.msra.mxu0 0
        %457 = vmatprep.subr.bf16.mxu0 0
        %458 = vmatpush1.bf16.xpose.msra.mxu0 0
        %459 = vmatprep.subr.bf16.mxu0 0
        %460 = vmatpush1.bf16.xpose.msra.mxu0 0
        %461 = vmatprep.subr.bf16.mxu0 0
        %462 = vmatpush1.bf16.xpose.msra.mxu0 0
        %463 = vmatprep.subr.bf16.mxu0 0
        %464 = vmatpush1.bf16.xpose.msra.mxu0 0
        %465 = vmatprep.mubr.bf16.mxu0 0
        %466 = vmatmul.mubr.bf16.gmra.mrb[0].mxu0 %v373
        %v467 = vpop.f32.mrb[0].mxu0
        %v468 = vadd.f32 0.0, %v467
        %v469 = vpop.f32.mrb[0].mxu0
        %v470 = vpop.f32.mrb[0].mxu0
        %v471 = vadd.f32 0.0, %v470
        %v472 = vpop.f32.mrb[0].mxu0
        %473 = vdwg.mxu0
        %v474 = vld [vmem:[%s355] sm:$0xf]
        %v475 = vld [vmem:[%s355 + $0x4] sm:$0xf]
        %v478 = vunpack.c.l.b16 %v474
        %v479 = vunpack.c.l.b16 %v475
        %v480 = vpack.c.b16 %v479, %v478
        %482 = vmatprep.subr.bf16.mxu0 0
        %483 = vmatpush1.bf16.xpose.msra.mxu0 %v480
        %484 = vmatprep.subr.bf16.mxu0 0
        %485 = vmatpush1.bf16.xpose.msra.mxu0 0
        %486 = vmatprep.subr.bf16.mxu0 0
        %487 = vmatpush1.bf16.xpose.msra.mxu0 0
        %488 = vmatprep.subr.bf16.mxu0 0
        %489 = vmatpush1.bf16.xpose.msra.mxu0 0
        %490 = vmatprep.subr.bf16.mxu0 0
        %491 = vmatpush1.bf16.xpose.msra.mxu0 0
        %492 = vmatprep.subr.bf16.mxu0 0
        %493 = vmatpush1.bf16.xpose.msra.mxu0 0
        %494 = vmatprep.subr.bf16.mxu0 0
        %495 = vmatpush1.bf16.xpose.msra.mxu0 0
        %496 = vmatprep.subr.bf16.mxu0 0
        %497 = vmatpush1.bf16.xpose.msra.mxu0 0
        %498 = vmatprep.subr.bf16.mxu0 0
        %499 = vmatpush1.bf16.xpose.msra.mxu0 0
        %500 = vmatprep.subr.bf16.mxu0 0
        %501 = vmatpush1.bf16.xpose.msra.mxu0 0
        %502 = vmatprep.subr.bf16.mxu0 0
        %503 = vmatpush1.bf16.xpose.msra.mxu0 0
        %504 = vmatprep.subr.bf16.mxu0 0
        %505 = vmatpush1.bf16.xpose.msra.mxu0 0
        %506 = vmatprep.subr.bf16.mxu0 0
        %507 = vmatpush1.bf16.xpose.msra.mxu0 0
        %508 = vmatprep.subr.bf16.mxu0 0
        %509 = vmatpush1.bf16.xpose.msra.mxu0 0
        %510 = vmatprep.subr.bf16.mxu0 0
        %511 = vmatpush1.bf16.xpose.msra.mxu0 0
        %512 = vmatprep.subr.bf16.mxu0 0
        %513 = vmatpush1.bf16.xpose.msra.mxu0 0
        %514 = vmatprep.mubr.bf16.mxu0 0
        %515 = vmatmul.mubr.bf16.gmra.mrb[0].mxu0 %v373
        %v516 = vpop.f32.mrb[0].mxu0
        %v517 = vadd.f32 0.0, %v516
        %v518 = vpop.f32.mrb[0].mxu0
        %v519 = vpop.f32.mrb[0].mxu0
        %v520 = vadd.f32 0.0, %v519
        %v521 = vpop.f32.mrb[0].mxu0
        %522 = vdwg.mxu0
        %v523 = vpack.c.bf16 %v424, %v423
        %v524 = vpack.c.bf16 %v471, %v468
        %vm525 = vcmask 130048
        %v527 = vsel %vm525, %v523, 0
        %v530 = vsel %vm525, %v524, 0
        %532 = vmatprep.subr.bf16.mxu0 0
        %533 = vmatpush1.bf16.xpose.msra.mxu0 %v530
        %534 = vmatprep.subr.bf16.mxu0 0
        %535 = vmatpush1.bf16.xpose.msra.mxu0 0
        %536 = vmatprep.subr.bf16.mxu0 0
        %537 = vmatpush1.bf16.xpose.msra.mxu0 0
        %538 = vmatprep.subr.bf16.mxu0 0
        %539 = vmatpush1.bf16.xpose.msra.mxu0 0
        %540 = vmatprep.subr.bf16.mxu0 0
        %541 = vmatpush1.bf16.xpose.msra.mxu0 0
        %542 = vmatprep.subr.bf16.mxu0 0
        %543 = vmatpush1.bf16.xpose.msra.mxu0 0
        %544 = vmatprep.subr.bf16.mxu0 0
        %545 = vmatpush1.bf16.xpose.msra.mxu0 0
        %546 = vmatprep.subr.bf16.mxu0 0
        %547 = vmatpush1.bf16.xpose.msra.mxu0 0
        %548 = vmatprep.subr.bf16.mxu0 0
        %549 = vmatpush1.bf16.xpose.msra.mxu0 0
        %550 = vmatprep.subr.bf16.mxu0 0
        %551 = vmatpush1.bf16.xpose.msra.mxu0 0
        %552 = vmatprep.subr.bf16.mxu0 0
        %553 = vmatpush1.bf16.xpose.msra.mxu0 0
        %554 = vmatprep.subr.bf16.mxu0 0
        %555 = vmatpush1.bf16.xpose.msra.mxu0 0
        %556 = vmatprep.subr.bf16.mxu0 0
        %557 = vmatpush1.bf16.xpose.msra.mxu0 0
        %558 = vmatprep.subr.bf16.mxu0 0
        %559 = vmatpush1.bf16.xpose.msra.mxu0 0
        %560 = vmatprep.subr.bf16.mxu0 0
        %561 = vmatpush1.bf16.xpose.msra.mxu0 0
        %562 = vmatprep.subr.bf16.mxu0 0
        %563 = vmatpush1.bf16.xpose.msra.mxu0 0
        %564 = vmatprep.mubr.bf16.mxu0 0
        %565 = vmatmul.mubr.bf16.gmra.mrb[0].mxu0 %v527
        %v566 = vpop.f32.mrb[0].mxu0
        %v567 = vadd.f32 0.0, %v566
        %v568 = vpop.f32.mrb[0].mxu0
        %v569 = vpop.f32.mrb[0].mxu0
        %v570 = vadd.f32 0.0, %v569
        %v571 = vpop.f32.mrb[0].mxu0
        %572 = vdwg.mxu0
        %v573 = vlaneseq
        %v574 = vshrl.u32 %v573, 7
        %v575 = vadd.s32 %v574, 8
        %v576 = vlaneseq
        %v577 = vand.u32 %v576, 127
        %vm578 = vcmp.le.s32.totalorder %v577, %v574
        %vm579 = vcmp.le.s32.totalorder %v577, %v575
        %v580 = vsel %vm578, %v567, -1e+30
        %v581 = vsel %vm579, %v570, -1e+30
        %v582 = vsel %vm525, %v580, -inf
        %583 = vmax.xlane.f32.xlu0 %v582
        %v584 = vpop.xlane.xlu0 %583
        %v585 = vsel %vm525, %v581, -inf
        %586 = vmax.xlane.f32.xlu0 %v585
        %v587 = vpop.xlane.xlu0 %586
        %v588 = vsub.f32 %v580, %v584
        %v589 = vsub.f32 %v581, %v587
        %v590 = vmul.f32 %v588, 1.442695
        %v591 = vpow.pop %v590
        %v592 = vmul.f32 %v589, 1.442695
        %v593 = vpow.pop %v592
        %v594 = vsel %vm525, %v591, 0.0
        %595 = vadd.xlane.f32.xlu0 %v594
        %v596 = vpop.xlane.xlu0 %595
        %v597 = vsel %vm525, %v593, 0.0
        %598 = vadd.xlane.f32.xlu0 %v597
        %v599 = vpop.xlane.xlu0 %598
        %v600 = vpack.c.bf16 %v593, %v591
        %v601 = vpack.c.bf16 %v520, %v517
        %v603 = vsel %vm525, %v600, 0
        %605 = vmatprep.subr.bf16.mxu0 0
        %606 = vmatpush1.bf16.msra.mxu0 %v601
        %607 = vmatprep.subr.bf16.mxu0 0
        %608 = vmatpush1.bf16.msra.mxu0 0
        %609 = vmatprep.subr.bf16.mxu0 0
        %610 = vmatpush1.bf16.msra.mxu0 0
        %611 = vmatprep.subr.bf16.mxu0 0
        %612 = vmatpush1.bf16.msra.mxu0 0
        %613 = vmatprep.subr.bf16.mxu0 0
        %614 = vmatpush1.bf16.msra.mxu0 0
        %615 = vmatprep.subr.bf16.mxu0 0
        %616 = vmatpush1.bf16.msra.mxu0 0
        %617 = vmatprep.subr.bf16.mxu0 0
        %618 = vmatpush1.bf16.msra.mxu0 0
        %619 = vmatprep.subr.bf16.mxu0 0
        %620 = vmatpush1.bf16.msra.mxu0 0
        %621 = vmatprep.subr.bf16.mxu0 0
        %622 = vmatpush1.bf16.msra.mxu0 0
        %623 = vmatprep.subr.bf16.mxu0 0
        %624 = vmatpush1.bf16.msra.mxu0 0
        %625 = vmatprep.subr.bf16.mxu0 0
        %626 = vmatpush1.bf16.msra.mxu0 0
        %627 = vmatprep.subr.bf16.mxu0 0
        %628 = vmatpush1.bf16.msra.mxu0 0
        %629 = vmatprep.subr.bf16.mxu0 0
        %630 = vmatpush1.bf16.msra.mxu0 0
        %631 = vmatprep.subr.bf16.mxu0 0
        %632 = vmatpush1.bf16.msra.mxu0 0
        %633 = vmatprep.subr.bf16.mxu0 0
        %634 = vmatpush1.bf16.msra.mxu0 0
        %635 = vmatprep.subr.bf16.mxu0 0
        %636 = vmatpush1.bf16.msra.mxu0 0
        %637 = vmatprep.mubr.bf16.mxu0 0
        %638 = vmatmul.mubr.bf16.gmra.mrb[0].mxu0 %v603
        %v639 = vpop.f32.mrb[0].mxu0
        %v640 = vadd.f32 0.0, %v639
        %v641 = vpop.f32.mrb[0].mxu0
        %v642 = vpop.f32.mrb[0].mxu0
        %v643 = vadd.f32 0.0, %v642
        %v644 = vpop.f32.mrb[0].mxu0
        %645 = vdwg.mxu0
        %v646 = vrcp.pop %v596
        %v647 = vrcp.pop %v599
        %v648 = vmul.f32 %v640, %v646
        %v649 = vmul.f32 %v643, %v647
        %v650 = vpack.c.bf16 %v649, %v648
        %v651 = vld [vmem:[%s362] sm:$0xf]
        %v652 = vld [vmem:[%s362 + $0x4] sm:$0xf]
        %v655 = vunpack.c.l.b16 %v651
        %v656 = vunpack.c.l.b16 %v652
        %v657 = vpack.c.b16 %v656, %v655
        %v660 = vsel %vm525, %v650, 0
        %662 = vmatprep.subr.bf16.mxu0 0
        %663 = vmatpush1.bf16.msra.mxu0 %v657
        %664 = vmatprep.subr.bf16.mxu0 0
        %665 = vmatpush1.bf16.msra.mxu0 0
        %666 = vmatprep.subr.bf16.mxu0 0
        %667 = vmatpush1.bf16.msra.mxu0 0
        %668 = vmatprep.subr.bf16.mxu0 0
        %669 = vmatpush1.bf16.msra.mxu0 0
        %670 = vmatprep.subr.bf16.mxu0 0
        %671 = vmatpush1.bf16.msra.mxu0 0
        %672 = vmatprep.subr.bf16.mxu0 0
        %673 = vmatpush1.bf16.msra.mxu0 0
        %674 = vmatprep.subr.bf16.mxu0 0
        %675 = vmatpush1.bf16.msra.mxu0 0
        %676 = vmatprep.subr.bf16.mxu0 0
        %677 = vmatpush1.bf16.msra.mxu0 0
        %678 = vmatprep.subr.bf16.mxu0 0
        %679 = vmatpush1.bf16.msra.mxu0 0
        %680 = vmatprep.subr.bf16.mxu0 0
        %681 = vmatpush1.bf16.msra.mxu0 0
        %682 = vmatprep.subr.bf16.mxu0 0
        %683 = vmatpush1.bf16.msra.mxu0 0
        %684 = vmatprep.subr.bf16.mxu0 0
        %685 = vmatpush1.bf16.msra.mxu0 0
        %686 = vmatprep.subr.bf16.mxu0 0
        %687 = vmatpush1.bf16.msra.mxu0 0
        %688 = vmatprep.subr.bf16.mxu0 0
        %689 = vmatpush1.bf16.msra.mxu0 0
        %690 = vmatprep.subr.bf16.mxu0 0
        %691 = vmatpush1.bf16.msra.mxu0 0
        %692 = vmatprep.subr.bf16.mxu0 0
        %693 = vmatpush1.bf16.msra.mxu0 0
        %694 = vmatprep.mubr.bf16.mxu0 0
        %695 = vmatmul.mubr.bf16.gmra.mrb[0].mxu0 %v660
        %v696 = vpop.f32.mrb[0].mxu0
        %v697 = vadd.f32 0.0, %v696
        %v698 = vpop.f32.mrb[0].mxu0
        %v699 = vpop.f32.mrb[0].mxu0
        %v700 = vadd.f32 0.0, %v699
        %v701 = vpop.f32.mrb[0].mxu0
        %702 = vdwg.mxu0
        %v703 = vld [vmem:[#allocation2] sm:$0xff]
        %v704 = vld [vmem:[#allocation2 + $0x8] sm:$0xff]
        %v705 = vadd.f32 %v703, %v697
        %v706 = vadd.f32 %v704, %v700
        %707 = vst [vmem:[#allocation2] sm:$0xff] %v705
        %708 = vst [vmem:[#allocation2 + $0x8] sm:$0xff] %v706
        %p709 = scmp.eq.s32.totalorder %s25, 7
        // Predicated region
        $region49: #{attention_base_forward.1} parent=43 // pred_check
          %p710 = pneg %p709
        $region50: #{attention_base_forward.1} parent=43 // pred_check_branch
          %712 = sbr.rel (%p710) target = $region52
        $region51: #{attention_base_forward.1} parent=43 // pred_region
          %v713 = vld [vmem:[#allocation2] sm:$0xff]
          %v714 = vld [vmem:[#allocation2 + $0x8] sm:$0xff]
          %v715 = vld [vmem:[%s5] sm:$0x1]
          %v717 = vlaneseq
          %v718 = vshrl.u32 %v717, 7
          %v719 = vsub.s32 0, %v718
          %v720 = vrot.slane %v715, %v719
          %v722 = vadd.f32 %v713, %v720
          %v723 = vadd.f32 %v714, %v720
          %724 = vst [vmem:[%s330] sm:$0xff] %v722
          %725 = vst [vmem:[%s330 + $0x8] sm:$0xff] %v723
        $region52: #{attention_base_forward.1} parent=43 // pred_fallthru
          _
        %s726 = sand.u32 %s195, 1
        %s727 = scalar_lea.sflag [#allocation4], %s726
        %s728 = sand.u32 %s195, 1
        %s729 = smul.addr %s728, 16
        %s730 = scalar_lea.vmem [#allocation3], %s729
        // Predicated region
        $region53: #{attention_base_forward.1} parent=43 // pred_check
          %p731 = pneg %p205
        $region54: #{attention_base_forward.1} parent=43 // pred_check_branch
          %733 = sbr.rel (%p731) target = $region56
        $region55: #{attention_base_forward.1} parent=43 // pred_region
          %s735 = ssub.s32 256, 256
          %736 = vsyncadd %s727, %s735
          %s737 = smul.addr %s24, 2
          %s738 = smul.addr %s737, 128
          %s739 = scalar_lea.hbm %s6, %s738
          %s740 = sshll.u32 %s730, 4
          %s741 = int_to_ptr.vmem [resolvable:$true] %s740
          %746 = dma.vmem_to_hbm [thread:$0]  %s741, 256, %s739, %s727, 128, 128, 8
        $region56: #{attention_base_forward.1} parent=43 // pred_fallthru
          _
      $region44: #{attention_base_forward.1} parent=5 // pred_fallthru
        _
      %p747 = scmp.le.s32.totalorder 2, %s15
      // Predicated region
      $region57: #{attention_base_forward.1} parent=5 // pred_check
        %p748 = pneg %p747
      $region58: #{attention_base_forward.1} parent=5 // pred_check_branch
        %750 = sbr.rel (%p748) target = $region60
      $region59: #{attention_base_forward.1} parent=5 // pred_region
        %s751 = ssub.s32 %s15, 2
        // Predicated region
        $region61: #{attention_base_forward.1} parent=59 // pred_check
          %p752 = pneg %p211
        $region62: #{attention_base_forward.1} parent=59 // pred_check_branch
          %754 = sbr.rel (%p752) target = $region64
        $region63: #{attention_base_forward.1} parent=59 // pred_region
          %s755 = sand.u32 %s196, 1
          %s756 = scalar_lea.sflag [#allocation4], %s755
          %s757 = sand.u32 %s196, 1
          %s758 = smul.addr %s757, 16
          %s759 = scalar_lea.vmem [#allocation3], %s758
          %760 = dma.done %s756, 256
        $region64: #{attention_base_forward.1} parent=59 // pred_fallthru
          _
      $region60: #{attention_base_forward.1} parent=5 // pred_fallthru
        _
    $region6: #{attention_base_forward.1} parent=1 // loop_footer
      %s19 = sadd.s32 1, %s15
    $region7: #{attention_base_forward.1} parent=1 // loop_footer_branch
      %14 = sbr.rel target = $region3
    $region8: #{attention_base_forward.1} parent=1 // loop_exit
      _
    %761 = vsyncpa [#allocation4], 1
    %s762 = scalar_lea.sflag [#allocation4], 1
    %763 = vsyncpa %s762, 1

</llo_original>
